<compile_context>
chip_gen: v7x
topology: tpu7x:2x2x1
jax: 0.10.0
libtpu: 0.0.40
codegen_flags: <defaults>
</compile_context>

<pallas_src>
import functools

import jax
import jax.numpy as jnp
from jax.experimental import pallas as pl
from jax.experimental.pallas import tpu as pltpu


def resblock_kernel(x_ref, w1_ref, b1_ref, w2_ref, b2_ref, out_ref,
                    pad_ref, col_ref, *, H, W, BG):
    # x_ref   : (BG, Cg, HW)        folded input activations (residual too)
    # w*_ref  : (Cg, 9*Cg)          im2col-packed, block-diagonal over fold
    # b*_ref  : (Cg, 1)             biases (tiled over the fold)
    # out_ref : (BG, Cg, HW)
    # pad_ref : (Cg, HW + 2*M)      flat plane with zero margins (scratch)
    # col_ref : (9*Cg, HW)          im2col patch matrix (scratch)
    Cg = x_ref.shape[1]
    HW = H * W
    M = W + 1                       # margin covers the largest tap shift

    # Column-validity masks for dx = +-1 taps (row shifts are handled by the
    # zero margins of pad_ref).  Computed once, reused for every group/conv.
    lane = jax.lax.broadcasted_iota(jnp.int32, (Cg, HW), 1)
    colx = lane % W
    mask_l = colx >= 1              # valid lanes when dx == -1
    mask_r = colx < (W - 1)         # valid lanes when dx == +1

    # Zero ONLY the margin strips (interior is fully overwritten below).
    # Done every grid step (not program_id-gated) so it is megacore-safe.
    zeros_m = jnp.zeros((Cg, M), jnp.float32)
    pad_ref[:, :M] = zeros_m
    pad_ref[:, M + HW:M + HW + M] = zeros_m

    def build_cols():
        # Scatter the 9 shifted (and dx-masked) patches of the plane stored
        # in pad_ref's interior into the im2col scratch at sublane offset
        # k*Cg.  The dx masks are absorbed into these stores.
        for ky in range(3):
            for kx in range(3):
                s = (ky - 1) * W + (kx - 1)
                patch = pad_ref[:, M + s:M + s + HW]        # (Cg, HW)
                if kx == 0:
                    patch = jnp.where(mask_l, patch, 0.0)
                elif kx == 2:
                    patch = jnp.where(mask_r, patch, 0.0)
                k = ky * 3 + kx
                col_ref[k * Cg:(k + 1) * Cg, :] = patch

    for bg in range(BG):
        x = x_ref[bg]                                        # (Cg, HW)

        # conv1: one MXU matmul over all 9 taps, + bias, ReLU.
        pad_ref[:, M:M + HW] = x
        build_cols()
        y1 = jnp.dot(w1_ref[...], col_ref[...],
                     preferred_element_type=jnp.float32)
        out1 = jnp.maximum(y1 + b1_ref[...], 0.0)

        # conv2: reuse the same scratches; margins are still zero.
        pad_ref[:, M:M + HW] = out1
        build_cols()
        y2 = jnp.dot(w2_ref[...], col_ref[...],
                     preferred_element_type=jnp.float32)
        out_ref[bg] = jnp.maximum(y2 + b2_ref[...] + x, 0.0).astype(out_ref.dtype)


def _pick_group_chunk(num_groups):
    """Groups per grid step; keep >=2 grid steps when possible (v7x 2 TCs)."""
    if num_groups <= 2:
        return 1
    for bg in (8, 4, 2):
        if num_groups % bg == 0 and num_groups // bg >= 2:
            return bg
    return 1


@jax.jit
def resblock_forward(x_nchw, w1, b1, w2, b2):
    """x_nchw: (N, C, H, W) f32; w1/w2: (C, C, 3, 3) OIHW; b1/b2: (C,)."""
    N, C, H, W = x_nchw.shape
    assert w1.shape[0] == C and w1.shape[1] == C, "ResBlock needs in_ch == out_ch"
    HW = H * W
    M = W + 1

    # Sublane fold: pack B0 images into the channel axis (free reshape).
    B0 = 1
    if C < 8 and 8 % C == 0 and N % (8 // C) == 0:
        B0 = 8 // C
    Cg = B0 * C
    G = N // B0                      # image groups
    BG = _pick_group_chunk(G)        # groups per grid step

    x_g = x_nchw.reshape(G, Cg, HW)  # metadata-only reshape

    # im2col weight packing (tiny): Wp[co_g, k*Cg + ci_g] = w[co, ci, ky, kx]
    # when both co_g and ci_g belong to the same folded image, else 0.
    eye = jnp.eye(B0, dtype=jnp.float32)

    def pack_w(w):
        wk = jnp.transpose(w, (2, 3, 0, 1)).reshape(9, C, C)      # (tap,co,ci)
        wkb = jnp.einsum('koi,bd->kbodi', wk, eye).reshape(9, Cg, Cg)
        return jnp.transpose(wkb, (1, 0, 2)).reshape(Cg, 9 * Cg)

    def pack_b(b):
        return jnp.tile(b, (B0,)).reshape(Cg, 1)

    w1p, w2p = pack_w(w1), pack_w(w2)
    b1p, b2p = pack_b(b1), pack_b(b2)

    kernel = functools.partial(resblock_kernel, H=H, W=W, BG=BG)
    out_g = pl.pallas_call(
        kernel,
        out_shape=jax.ShapeDtypeStruct((G, Cg, HW), jnp.float32),
        grid_spec=pltpu.PrefetchScalarGridSpec(
            num_scalar_prefetch=0,
            grid=(G // BG,),
            in_specs=[
                pl.BlockSpec((BG, Cg, HW), lambda g: (g, 0, 0)),   # x / residual
                pl.BlockSpec((Cg, 9 * Cg), lambda g: (0, 0)),      # w1 (packed)
                pl.BlockSpec((Cg, 1), lambda g: (0, 0)),           # b1
                pl.BlockSpec((Cg, 9 * Cg), lambda g: (0, 0)),      # w2 (packed)
                pl.BlockSpec((Cg, 1), lambda g: (0, 0)),           # b2
            ],
            out_specs=pl.BlockSpec((BG, Cg, HW), lambda g: (g, 0, 0)),
            scratch_shapes=[
                pltpu.VMEM((Cg, HW + 2 * M), jnp.float32),         # padded plane
                pltpu.VMEM((9 * Cg, HW), jnp.float32),             # im2col matrix
            ],
        ),
        compiler_params=pltpu.CompilerParams(
            dimension_semantics=("parallel",),
            vmem_limit_bytes=32 * 1024 * 1024),
    )(x_g, w1p, b1p, w2p, b2p)

    return out_g.reshape(N, C, H, W)   # metadata-only reshape back to NCHW


def resblock_reference(x, w1, b1, w2, b2):
    """Plain-JAX reference matching the PyTorch module semantics."""
    def conv(inp, w, b):
        y = jax.lax.conv_general_dilated(
            inp, w, window_strides=(1, 1), padding=((1, 1), (1, 1)),
            dimension_numbers=("NCHW", "OIHW", "NCHW"),
            precision=jax.lax.Precision.HIGHEST)
        return y + b[None, :, None, None]

    out = jax.nn.relu(conv(x, w1, b1))
    out = conv(out, w2, b2)
    out = out + x
    return jax.nn.relu(out)


if __name__ == "__main__":
    # Small shapes consistent with the module (in_ch == out_ch, stride=1).
    N, C, H, W = 2, 4, 16, 16

    key = jax.random.PRNGKey(0)
    kx, kw1, kb1, kw2, kb2 = jax.random.split(key, 5)

    x = jax.random.normal(kx, (N, C, H, W), dtype=jnp.float32)
    w1 = jax.random.normal(kw1, (C, C, 3, 3), dtype=jnp.float32) * 0.1
    b1 = jax.random.normal(kb1, (C,), dtype=jnp.float32) * 0.1
    w2 = jax.random.normal(kw2, (C, C, 3, 3), dtype=jnp.float32) * 0.1
    b2 = jax.random.normal(kb2, (C,), dtype=jnp.float32) * 0.1

    out = jax.block_until_ready(resblock_forward(x, w1, b1, w2, b2))
    ref = jax.block_until_ready(resblock_reference(x, w1, b1, w2, b2))

    assert out.shape == (N, C, H, W) and out.dtype == jnp.float32
    # Tolerance relaxed vs. v1: matmuls now use the default (single-pass MXU)
    # precision instead of HIGHEST f32 emulation (expected numerical change).
    assert jnp.allclose(out, ref, rtol=1e-2, atol=3e-2), (
        f"max abs err {jnp.max(jnp.abs(out - ref))}")

    print("KERNEL_OK")
</pallas_src>

<mosaic_0001>
module attributes {stable_mosaic.version = 11 : i64} {
  func.func @resblock_kernel(%arg0: i32, %arg1: memref<1x8x256xf32, #tpu.memory_space<vmem>>, %arg2: memref<8x72xf32, #tpu.memory_space<vmem>>, %arg3: memref<8x1xf32, #tpu.memory_space<vmem>>, %arg4: memref<8x72xf32, #tpu.memory_space<vmem>>, %arg5: memref<8x1xf32, #tpu.memory_space<vmem>>, %arg6: memref<1x8x256xf32, #tpu.memory_space<vmem>>, %arg7: memref<8x290xf32, #tpu.memory_space<vmem>>, %arg8: memref<72x256xf32, #tpu.memory_space<vmem>>) attributes {dimension_semantics = [#tpu.dimension_semantics<parallel>], iteration_bounds = array<i64: 1>, scalar_prefetch = 0 : i64, scratch_operands = 2 : i64, tpu.core_type = #tpu.core_type<tc>, window_params = [{transform_indices = @transform_0, window_bounds = array<i64: 1, 8, 256>}, {pipeline_mode = #tpu.pipeline_mode<synchronous>, transform_indices = @transform_1, window_bounds = array<i64: 8, 72>}, {pipeline_mode = #tpu.pipeline_mode<synchronous>, transform_indices = @transform_2, window_bounds = array<i64: 8, 1>}, {pipeline_mode = #tpu.pipeline_mode<synchronous>, transform_indices = @transform_3, window_bounds = array<i64: 8, 72>}, {pipeline_mode = #tpu.pipeline_mode<synchronous>, transform_indices = @transform_4, window_bounds = array<i64: 8, 1>}, {transform_indices = @transform_5, window_bounds = array<i64: 1, 8, 256>}]} {
    %0 = tpu.iota {dimensions = array<i32: 1>} : vector<8x256xi32>
    %c16_i32 = arith.constant 16 : i32
    %c0_i32 = arith.constant 0 : i32
    %1 = arith.cmpi eq, %c16_i32, %c0_i32 : i32
    %c1_i32 = arith.constant 1 : i32
    %2 = arith.select %1, %c1_i32, %c16_i32 : i32
    %3 = vector.broadcast %2 : i32 to vector<8x256xi32>
    %4 = arith.remsi %0, %3 : vector<8x256xi32>
    %c0_i32_0 = arith.constant 0 : i32
    %5 = vector.broadcast %c0_i32_0 : i32 to vector<8x256xi32>
    %6 = arith.cmpi ne, %4, %5 : vector<8x256xi32>
    %c0_i32_1 = arith.constant 0 : i32
    %7 = vector.broadcast %c0_i32_1 : i32 to vector<8x256xi32>
    %8 = arith.cmpi slt, %4, %7 : vector<8x256xi32>
    %c0_i32_2 = arith.constant 0 : i32
    %9 = arith.cmpi slt, %2, %c0_i32_2 : i32
    %10 = vector.broadcast %9 : i1 to vector<8x256xi1>
    %11 = vector.broadcast %10 : vector<8x256xi1> to vector<8x256xi1>
    %12 = arith.xori %8, %11 : vector<8x256xi1>
    %13 = arith.andi %12, %6 : vector<8x256xi1>
    %14 = vector.broadcast %2 : i32 to vector<8x256xi32>
    %15 = arith.addi %4, %14 : vector<8x256xi32>
    %16 = arith.select %13, %15, %4 : vector<8x256xi1>, vector<8x256xi32>
    %c1_i32_3 = arith.constant 1 : i32
    %17 = vector.broadcast %c1_i32_3 : i32 to vector<8x256xi32>
    %18 = arith.cmpi sge, %16, %17 : vector<8x256xi32>
    %c15_i32 = arith.constant 15 : i32
    %19 = vector.broadcast %c15_i32 : i32 to vector<8x256xi32>
    %20 = arith.cmpi slt, %16, %19 : vector<8x256xi32>
    %cst = arith.constant 0.000000e+00 : f32
    %21 = vector.broadcast %cst : f32 to vector<8x17xf32>
    %c0 = arith.constant 0 : index
    %c0_4 = arith.constant 0 : index
    %22 = vector.load %arg7[%c0, %c0_4] : memref<8x290xf32, #tpu.memory_space<vmem>>, vector<8x17xf32>
    tpu.vector_store %arg7[%c0, %c0_4], %21 {strides = array<i32>} : memref<8x290xf32, #tpu.memory_space<vmem>>, vector<8x17xf32>,
    %c0_5 = arith.constant 0 : index
    %c273 = arith.constant 273 : index
    %23 = vector.load %arg7[%c0_5, %c273] : memref<8x290xf32, #tpu.memory_space<vmem>>, vector<8x17xf32>
    tpu.vector_store %arg7[%c0_5, %c273], %21 {strides = array<i32>} : memref<8x290xf32, #tpu.memory_space<vmem>>, vector<8x17xf32>,
    %c0_6 = arith.constant 0 : index
    %c0_7 = arith.constant 0 : index
    %c0_8 = arith.constant 0 : index
    %24 = vector.load %arg1[%c0_6, %c0_7, %c0_8] : memref<1x8x256xf32, #tpu.memory_space<vmem>>, vector<1x8x256xf32>
    %25 = vector.shape_cast %24 : vector<1x8x256xf32> to vector<8x256xf32>
    %c0_9 = arith.constant 0 : index
    %c17 = arith.constant 17 : index
    %26 = vector.load %arg7[%c0_9, %c17] : memref<8x290xf32, #tpu.memory_space<vmem>>, vector<8x256xf32>
    tpu.vector_store %arg7[%c0_9, %c17], %25 {strides = array<i32>} : memref<8x290xf32, #tpu.memory_space<vmem>>, vector<8x256xf32>,
    %c0_10 = arith.constant 0 : index
    %c0_11 = arith.constant 0 : index
    %27 = vector.load %arg7[%c0_10, %c0_11] : memref<8x290xf32, #tpu.memory_space<vmem>>, vector<8x256xf32>
    %cst_12 = arith.constant 0.000000e+00 : f32
    %28 = vector.broadcast %cst_12 : f32 to vector<8x256xf32>
    %29 = arith.select %18, %27, %28 : vector<8x256xi1>, vector<8x256xf32>
    %c0_13 = arith.constant 0 : index
    %c0_14 = arith.constant 0 : index
    %30 = vector.load %arg8[%c0_13, %c0_14] : memref<72x256xf32, #tpu.memory_space<vmem>>, vector<8x256xf32>
    tpu.vector_store %arg8[%c0_13, %c0_14], %29 {strides = array<i32>} : memref<72x256xf32, #tpu.memory_space<vmem>>, vector<8x256xf32>,
    %c0_15 = arith.constant 0 : index
    %c1 = arith.constant 1 : index
    %31 = vector.load %arg7[%c0_15, %c1] : memref<8x290xf32, #tpu.memory_space<vmem>>, vector<8x256xf32>
    %c8 = arith.constant 8 : index
    %c0_16 = arith.constant 0 : index
    %32 = vector.load %arg8[%c8, %c0_16] : memref<72x256xf32, #tpu.memory_space<vmem>>, vector<8x256xf32>
    tpu.vector_store %arg8[%c8, %c0_16], %31 {strides = array<i32>} : memref<72x256xf32, #tpu.memory_space<vmem>>, vector<8x256xf32>,
    %c0_17 = arith.constant 0 : index
    %c2 = arith.constant 2 : index
    %33 = vector.load %arg7[%c0_17, %c2] : memref<8x290xf32, #tpu.memory_space<vmem>>, vector<8x256xf32>
    %cst_18 = arith.constant 0.000000e+00 : f32
    %34 = vector.broadcast %cst_18 : f32 to vector<8x256xf32>
    %35 = arith.select %20, %33, %34 : vector<8x256xi1>, vector<8x256xf32>
    %c16 = arith.constant 16 : index
    %c0_19 = arith.constant 0 : index
    %36 = vector.load %arg8[%c16, %c0_19] : memref<72x256xf32, #tpu.memory_space<vmem>>, vector<8x256xf32>
    tpu.vector_store %arg8[%c16, %c0_19], %35 {strides = array<i32>} : memref<72x256xf32, #tpu.memory_space<vmem>>, vector<8x256xf32>,
    %c0_20 = arith.constant 0 : index
    %c16_21 = arith.constant 16 : index
    %37 = vector.load %arg7[%c0_20, %c16_21] : memref<8x290xf32, #tpu.memory_space<vmem>>, vector<8x256xf32>
    %cst_22 = arith.constant 0.000000e+00 : f32
    %38 = vector.broadcast %cst_22 : f32 to vector<8x256xf32>
    %39 = arith.select %18, %37, %38 : vector<8x256xi1>, vector<8x256xf32>
    %c24 = arith.constant 24 : index
    %c0_23 = arith.constant 0 : index
    %40 = vector.load %arg8[%c24, %c0_23] : memref<72x256xf32, #tpu.memory_space<vmem>>, vector<8x256xf32>
    tpu.vector_store %arg8[%c24, %c0_23], %39 {strides = array<i32>} : memref<72x256xf32, #tpu.memory_space<vmem>>, vector<8x256xf32>,
    %c0_24 = arith.constant 0 : index
    %c17_25 = arith.constant 17 : index
    %41 = vector.load %arg7[%c0_24, %c17_25] : memref<8x290xf32, #tpu.memory_space<vmem>>, vector<8x256xf32>
    %c32 = arith.constant 32 : index
    %c0_26 = arith.constant 0 : index
    %42 = vector.load %arg8[%c32, %c0_26] : memref<72x256xf32, #tpu.memory_space<vmem>>, vector<8x256xf32>
    tpu.vector_store %arg8[%c32, %c0_26], %41 {strides = array<i32>} : memref<72x256xf32, #tpu.memory_space<vmem>>, vector<8x256xf32>,
    %c0_27 = arith.constant 0 : index
    %c18 = arith.constant 18 : index
    %43 = vector.load %arg7[%c0_27, %c18] : memref<8x290xf32, #tpu.memory_space<vmem>>, vector<8x256xf32>
    %cst_28 = arith.constant 0.000000e+00 : f32
    %44 = vector.broadcast %cst_28 : f32 to vector<8x256xf32>
    %45 = arith.select %20, %43, %44 : vector<8x256xi1>, vector<8x256xf32>
    %c40 = arith.constant 40 : index
    %c0_29 = arith.constant 0 : index
    %46 = vector.load %arg8[%c40, %c0_29] : memref<72x256xf32, #tpu.memory_space<vmem>>, vector<8x256xf32>
    tpu.vector_store %arg8[%c40, %c0_29], %45 {strides = array<i32>} : memref<72x256xf32, #tpu.memory_space<vmem>>, vector<8x256xf32>,
    %c0_30 = arith.constant 0 : index
    %c32_31 = arith.constant 32 : index
    %47 = vector.load %arg7[%c0_30, %c32_31] : memref<8x290xf32, #tpu.memory_space<vmem>>, vector<8x256xf32>
    %cst_32 = arith.constant 0.000000e+00 : f32
    %48 = vector.broadcast %cst_32 : f32 to vector<8x256xf32>
    %49 = arith.select %18, %47, %48 : vector<8x256xi1>, vector<8x256xf32>
    %c48 = arith.constant 48 : index
    %c0_33 = arith.constant 0 : index
    %50 = vector.load %arg8[%c48, %c0_33] : memref<72x256xf32, #tpu.memory_space<vmem>>, vector<8x256xf32>
    tpu.vector_store %arg8[%c48, %c0_33], %49 {strides = array<i32>} : memref<72x256xf32, #tpu.memory_space<vmem>>, vector<8x256xf32>,
    %c0_34 = arith.constant 0 : index
    %c33 = arith.constant 33 : index
    %51 = vector.load %arg7[%c0_34, %c33] : memref<8x290xf32, #tpu.memory_space<vmem>>, vector<8x256xf32>
    %c56 = arith.constant 56 : index
    %c0_35 = arith.constant 0 : index
    %52 = vector.load %arg8[%c56, %c0_35] : memref<72x256xf32, #tpu.memory_space<vmem>>, vector<8x256xf32>
    tpu.vector_store %arg8[%c56, %c0_35], %51 {strides = array<i32>} : memref<72x256xf32, #tpu.memory_space<vmem>>, vector<8x256xf32>,
    %c0_36 = arith.constant 0 : index
    %c34 = arith.constant 34 : index
    %53 = vector.load %arg7[%c0_36, %c34] : memref<8x290xf32, #tpu.memory_space<vmem>>, vector<8x256xf32>
    %cst_37 = arith.constant 0.000000e+00 : f32
    %54 = vector.broadcast %cst_37 : f32 to vector<8x256xf32>
    %55 = arith.select %20, %53, %54 : vector<8x256xi1>, vector<8x256xf32>
    %c64 = arith.constant 64 : index
    %c0_38 = arith.constant 0 : index
    %56 = vector.load %arg8[%c64, %c0_38] : memref<72x256xf32, #tpu.memory_space<vmem>>, vector<8x256xf32>
    tpu.vector_store %arg8[%c64, %c0_38], %55 {strides = array<i32>} : memref<72x256xf32, #tpu.memory_space<vmem>>, vector<8x256xf32>,
    %c0_39 = arith.constant 0 : index
    %c0_40 = arith.constant 0 : index
    %57 = vector.load %arg2[%c0_39, %c0_40] : memref<8x72xf32, #tpu.memory_space<vmem>>, vector<8x72xf32>
    %c0_41 = arith.constant 0 : index
    %c0_42 = arith.constant 0 : index
    %58 = vector.load %arg8[%c0_41, %c0_42] : memref<72x256xf32, #tpu.memory_space<vmem>>, vector<72x256xf32>
    %cst_43 = arith.constant dense<0.000000e+00> : vector<8x256xf32>
    %59 = tpu.matmul %57, %58, %cst_43 {dimension_numbers = #tpu.dot_dimension_numbers<[1], [0], [0], [1], [0, 0, 1, 1], [], []>} : vector<8x72xf32>, vector<72x256xf32>, vector<8x256xf32> -> vector<8x256xf32>
    %c0_44 = arith.constant 0 : index
    %c0_45 = arith.constant 0 : index
    %60 = vector.load %arg3[%c0_44, %c0_45] : memref<8x1xf32, #tpu.memory_space<vmem>>, vector<8x1xf32>
    %61 = vector.broadcast %60 : vector<8x1xf32> to vector<8x256xf32>
    %62 = arith.addf %59, %61 : vector<8x256xf32>
    %cst_46 = arith.constant 0.000000e+00 : f32
    %63 = vector.broadcast %cst_46 : f32 to vector<8x256xf32>
    %64 = arith.maximumf %62, %63 : vector<8x256xf32>
    %c0_47 = arith.constant 0 : index
    %c17_48 = arith.constant 17 : index
    %65 = vector.load %arg7[%c0_47, %c17_48] : memref<8x290xf32, #tpu.memory_space<vmem>>, vector<8x256xf32>
    tpu.vector_store %arg7[%c0_47, %c17_48], %64 {strides = array<i32>} : memref<8x290xf32, #tpu.memory_space<vmem>>, vector<8x256xf32>,
    %c0_49 = arith.constant 0 : index
    %c0_50 = arith.constant 0 : index
    %66 = vector.load %arg7[%c0_49, %c0_50] : memref<8x290xf32, #tpu.memory_space<vmem>>, vector<8x256xf32>
    %cst_51 = arith.constant 0.000000e+00 : f32
    %67 = vector.broadcast %cst_51 : f32 to vector<8x256xf32>
    %68 = arith.select %18, %66, %67 : vector<8x256xi1>, vector<8x256xf32>
    %c0_52 = arith.constant 0 : index
    %c0_53 = arith.constant 0 : index
    %69 = vector.load %arg8[%c0_52, %c0_53] : memref<72x256xf32, #tpu.memory_space<vmem>>, vector<8x256xf32>
    tpu.vector_store %arg8[%c0_52, %c0_53], %68 {strides = array<i32>} : memref<72x256xf32, #tpu.memory_space<vmem>>, vector<8x256xf32>,
    %c0_54 = arith.constant 0 : index
    %c1_55 = arith.constant 1 : index
    %70 = vector.load %arg7[%c0_54, %c1_55] : memref<8x290xf32, #tpu.memory_space<vmem>>, vector<8x256xf32>
    %c8_56 = arith.constant 8 : index
    %c0_57 = arith.constant 0 : index
    %71 = vector.load %arg8[%c8_56, %c0_57] : memref<72x256xf32, #tpu.memory_space<vmem>>, vector<8x256xf32>
    tpu.vector_store %arg8[%c8_56, %c0_57], %70 {strides = array<i32>} : memref<72x256xf32, #tpu.memory_space<vmem>>, vector<8x256xf32>,
    %c0_58 = arith.constant 0 : index
    %c2_59 = arith.constant 2 : index
    %72 = vector.load %arg7[%c0_58, %c2_59] : memref<8x290xf32, #tpu.memory_space<vmem>>, vector<8x256xf32>
    %cst_60 = arith.constant 0.000000e+00 : f32
    %73 = vector.broadcast %cst_60 : f32 to vector<8x256xf32>
    %74 = arith.select %20, %72, %73 : vector<8x256xi1>, vector<8x256xf32>
    %c16_61 = arith.constant 16 : index
    %c0_62 = arith.constant 0 : index
    %75 = vector.load %arg8[%c16_61, %c0_62] : memref<72x256xf32, #tpu.memory_space<vmem>>, vector<8x256xf32>
    tpu.vector_store %arg8[%c16_61, %c0_62], %74 {strides = array<i32>} : memref<72x256xf32, #tpu.memory_space<vmem>>, vector<8x256xf32>,
    %c0_63 = arith.constant 0 : index
    %c16_64 = arith.constant 16 : index
    %76 = vector.load %arg7[%c0_63, %c16_64] : memref<8x290xf32, #tpu.memory_space<vmem>>, vector<8x256xf32>
    %cst_65 = arith.constant 0.000000e+00 : f32
    %77 = vector.broadcast %cst_65 : f32 to vector<8x256xf32>
    %78 = arith.select %18, %76, %77 : vector<8x256xi1>, vector<8x256xf32>
    %c24_66 = arith.constant 24 : index
    %c0_67 = arith.constant 0 : index
    %79 = vector.load %arg8[%c24_66, %c0_67] : memref<72x256xf32, #tpu.memory_space<vmem>>, vector<8x256xf32>
    tpu.vector_store %arg8[%c24_66, %c0_67], %78 {strides = array<i32>} : memref<72x256xf32, #tpu.memory_space<vmem>>, vector<8x256xf32>,
    %c0_68 = arith.constant 0 : index
    %c17_69 = arith.constant 17 : index
    %80 = vector.load %arg7[%c0_68, %c17_69] : memref<8x290xf32, #tpu.memory_space<vmem>>, vector<8x256xf32>
    %c32_70 = arith.constant 32 : index
    %c0_71 = arith.constant 0 : index
    %81 = vector.load %arg8[%c32_70, %c0_71] : memref<72x256xf32, #tpu.memory_space<vmem>>, vector<8x256xf32>
    tpu.vector_store %arg8[%c32_70, %c0_71], %80 {strides = array<i32>} : memref<72x256xf32, #tpu.memory_space<vmem>>, vector<8x256xf32>,
    %c0_72 = arith.constant 0 : index
    %c18_73 = arith.constant 18 : index
    %82 = vector.load %arg7[%c0_72, %c18_73] : memref<8x290xf32, #tpu.memory_space<vmem>>, vector<8x256xf32>
    %cst_74 = arith.constant 0.000000e+00 : f32
    %83 = vector.broadcast %cst_74 : f32 to vector<8x256xf32>
    %84 = arith.select %20, %82, %83 : vector<8x256xi1>, vector<8x256xf32>
    %c40_75 = arith.constant 40 : index
    %c0_76 = arith.constant 0 : index
    %85 = vector.load %arg8[%c40_75, %c0_76] : memref<72x256xf32, #tpu.memory_space<vmem>>, vector<8x256xf32>
    tpu.vector_store %arg8[%c40_75, %c0_76], %84 {strides = array<i32>} : memref<72x256xf32, #tpu.memory_space<vmem>>, vector<8x256xf32>,
    %c0_77 = arith.constant 0 : index
    %c32_78 = arith.constant 32 : index
    %86 = vector.load %arg7[%c0_77, %c32_78] : memref<8x290xf32, #tpu.memory_space<vmem>>, vector<8x256xf32>
    %cst_79 = arith.constant 0.000000e+00 : f32
    %87 = vector.broadcast %cst_79 : f32 to vector<8x256xf32>
    %88 = arith.select %18, %86, %87 : vector<8x256xi1>, vector<8x256xf32>
    %c48_80 = arith.constant 48 : index
    %c0_81 = arith.constant 0 : index
    %89 = vector.load %arg8[%c48_80, %c0_81] : memref<72x256xf32, #tpu.memory_space<vmem>>, vector<8x256xf32>
    tpu.vector_store %arg8[%c48_80, %c0_81], %88 {strides = array<i32>} : memref<72x256xf32, #tpu.memory_space<vmem>>, vector<8x256xf32>,
    %c0_82 = arith.constant 0 : index
    %c33_83 = arith.constant 33 : index
    %90 = vector.load %arg7[%c0_82, %c33_83] : memref<8x290xf32, #tpu.memory_space<vmem>>, vector<8x256xf32>
    %c56_84 = arith.constant 56 : index
    %c0_85 = arith.constant 0 : index
    %91 = vector.load %arg8[%c56_84, %c0_85] : memref<72x256xf32, #tpu.memory_space<vmem>>, vector<8x256xf32>
    tpu.vector_store %arg8[%c56_84, %c0_85], %90 {strides = array<i32>} : memref<72x256xf32, #tpu.memory_space<vmem>>, vector<8x256xf32>,
    %c0_86 = arith.constant 0 : index
    %c34_87 = arith.constant 34 : index
    %92 = vector.load %arg7[%c0_86, %c34_87] : memref<8x290xf32, #tpu.memory_space<vmem>>, vector<8x256xf32>
    %cst_88 = arith.constant 0.000000e+00 : f32
    %93 = vector.broadcast %cst_88 : f32 to vector<8x256xf32>
    %94 = arith.select %20, %92, %93 : vector<8x256xi1>, vector<8x256xf32>
    %c64_89 = arith.constant 64 : index
    %c0_90 = arith.constant 0 : index
    %95 = vector.load %arg8[%c64_89, %c0_90] : memref<72x256xf32, #tpu.memory_space<vmem>>, vector<8x256xf32>
    tpu.vector_store %arg8[%c64_89, %c0_90], %94 {strides = array<i32>} : memref<72x256xf32, #tpu.memory_space<vmem>>, vector<8x256xf32>,
    %c0_91 = arith.constant 0 : index
    %c0_92 = arith.constant 0 : index
    %96 = vector.load %arg4[%c0_91, %c0_92] : memref<8x72xf32, #tpu.memory_space<vmem>>, vector<8x72xf32>
    %c0_93 = arith.constant 0 : index
    %c0_94 = arith.constant 0 : index
    %97 = vector.load %arg8[%c0_93, %c0_94] : memref<72x256xf32, #tpu.memory_space<vmem>>, vector<72x256xf32>
    %cst_95 = arith.constant dense<0.000000e+00> : vector<8x256xf32>
    %98 = tpu.matmul %96, %97, %cst_95 {dimension_numbers = #tpu.dot_dimension_numbers<[1], [0], [0], [1], [0, 0, 1, 1], [], []>} : vector<8x72xf32>, vector<72x256xf32>, vector<8x256xf32> -> vector<8x256xf32>
    %c0_96 = arith.constant 0 : index
    %c0_97 = arith.constant 0 : index
    %99 = vector.load %arg5[%c0_96, %c0_97] : memref<8x1xf32, #tpu.memory_space<vmem>>, vector<8x1xf32>
    %100 = vector.broadcast %99 : vector<8x1xf32> to vector<8x256xf32>
    %101 = arith.addf %98, %100 : vector<8x256xf32>
    %102 = arith.addf %101, %25 : vector<8x256xf32>
    %cst_98 = arith.constant 0.000000e+00 : f32
    %103 = vector.broadcast %cst_98 : f32 to vector<8x256xf32>
    %104 = arith.maximumf %102, %103 : vector<8x256xf32>
    %c0_99 = arith.constant 0 : index
    %c0_100 = arith.constant 0 : index
    %c0_101 = arith.constant 0 : index
    %105 = vector.load %arg6[%c0_99, %c0_100, %c0_101] : memref<1x8x256xf32, #tpu.memory_space<vmem>>, vector<1x8x256xf32>
    %106 = vector.shape_cast %105 : vector<1x8x256xf32> to vector<8x256xf32>
    %107 = vector.shape_cast %104 : vector<8x256xf32> to vector<1x8x256xf32>
    tpu.vector_store %arg6[%c0_99, %c0_100, %c0_101], %107 {strides = array<i32>} : memref<1x8x256xf32, #tpu.memory_space<vmem>>, vector<1x8x256xf32>,
    return
  }
  func.func @transform_0(%arg0: i32) -> (i32, i32, i32) {
    %c0_i32 = arith.constant 0 : i32
    %c0_i32_0 = arith.constant 0 : i32
    %c0_i32_1 = arith.constant 0 : i32
    return %arg0, %c0_i32, %c0_i32_0 : i32, i32, i32
  }
  func.func @transform_1(%arg0: i32) -> (i32, i32) {
    %c0_i32 = arith.constant 0 : i32
    %c0_i32_0 = arith.constant 0 : i32
    %c0_i32_1 = arith.constant 0 : i32
    return %c0_i32, %c0_i32_0 : i32, i32
  }
  func.func @transform_2(%arg0: i32) -> (i32, i32) {
    %c0_i32 = arith.constant 0 : i32
    %c0_i32_0 = arith.constant 0 : i32
    %c0_i32_1 = arith.constant 0 : i32
    return %c0_i32, %c0_i32_0 : i32, i32
  }
  func.func @transform_3(%arg0: i32) -> (i32, i32) {
    %c0_i32 = arith.constant 0 : i32
    %c0_i32_0 = arith.constant 0 : i32
    %c0_i32_1 = arith.constant 0 : i32
    return %c0_i32, %c0_i32_0 : i32, i32
  }
  func.func @transform_4(%arg0: i32) -> (i32, i32) {
    %c0_i32 = arith.constant 0 : i32
    %c0_i32_0 = arith.constant 0 : i32
    %c0_i32_1 = arith.constant 0 : i32
    return %c0_i32, %c0_i32_0 : i32, i32
  }
  func.func @transform_5(%arg0: i32) -> (i32, i32, i32) {
    %c0_i32 = arith.constant 0 : i32
    %c0_i32_0 = arith.constant 0 : i32
    %c0_i32_1 = arith.constant 0 : i32
    return %arg0, %c0_i32, %c0_i32_0 : i32, i32, i32
  }
}

</mosaic_0001>

<llo_original>
// kernel: tile.13
$region0: #{tile.13}
  #allocation0 [shape = 's32[1]{0}', space=sflag, size = 0x4, scoped, tag = 'scoped memory for tile.13']
  %s0 = inlined_call_operand.vmem [shape: f32[4], index: 0, kind: input, shape index: {}]
  %s1 = inlined_call_operand.vmem [shape: f32[2,4], index: 1, kind: output, shape index: {}]
  // Predicated region
  $region2: #{tile.13} parent=0 // pred_check
    _
  $region3: #{tile.13} parent=0 // pred_check_branch
    %3 = sbr.rel (0) target = $region5
  $region4: #{tile.13} parent=0 // pred_region
    _
  $region5: #{tile.13} parent=0 // pred_fallthru
    _
  %v4 = vld [vmem:[%s0] ss:$0 sm:$0xff]
  %5 = vst [vmem:[%s1] sm:$0x3] %v4

// kernel: tile.0
$region0: #{tile.0}
  %s0 = inlined_call_operand.vmem [shape: f32[2,4], index: 0, kind: input, shape index: {}]
  %s1 = inlined_call_operand.vmem [shape: f32[8,1], index: 1, kind: output, shape index: {}]
  $region1: #{tile.0} parent=0
    #allocation0 [shape = 'u8[4096]{0}', space=vmem, size = 0x1000, scoped, tag = 'scoped mem for input reshape']
    %s3 = sshllo.u32 0, 2
    %v4 = vld [vmem:[%s0] sm:%s3]
    %5 = vst [vmem:[#allocation0] sm:%s3] %v4
    %v6 = vld [vmem:[#allocation0] sm:$0x3]
    %vm7 = vcmask 7168
    %8 = vst.msk [vmem:[%s1] ss:$4 sm:$0x3] %vm7, %v6
    %v9 = vld [vmem:[#allocation0] sm:$0x3]
    %10 = vrot.lane.b32.xlu0 %v9, 127
    %v11 = vpop.permute.xlu0 %10
    %vm12 = vcmask 7168
    %s13 = scalar_lea.vmem %s1, 1
    %14 = vst.msk [vmem:[%s13] ss:$4 sm:$0x3] %vm12, %v11
    %v15 = vld [vmem:[#allocation0] sm:$0x3]
    %16 = vrot.lane.b32.xlu0 %v15, 126
    %v17 = vpop.permute.xlu0 %16
    %vm18 = vcmask 7168
    %s19 = scalar_lea.vmem %s1, 2
    %20 = vst.msk [vmem:[%s19] ss:$4 sm:$0x3] %vm18, %v17
    %v21 = vld [vmem:[#allocation0] sm:$0x3]
    %22 = vrot.lane.b32.xlu0 %v21, 125
    %v23 = vpop.permute.xlu0 %22
    %vm24 = vcmask 7168
    %s25 = scalar_lea.vmem %s1, 3
    %26 = vst.msk [vmem:[%s25] ss:$4 sm:$0x3] %vm24, %v23

// kernel: resblock_forward.1
$region0: #{resblock_forward.1}
  #allocation0 [shape = 'u32[]', space=smem, size = 0x4, offset = 0x4, fixed_abs, tag = 'smem constant byte address 0x4 - core index']
  #allocation1 [shape = 'u32[144,128]{1,0:T(1,128)}', space=vmem, size = 0x12000, scoped, tag = 'internal scratch']
  #allocation2 [shape = 'f32[8,290]{1,0:T(8,128)}', space=vmem, size = 0x3000, scoped, tag = 'scratch operand']
  #allocation3 [shape = 'f32[72,256]{1,0:T(8,128)}', space=vmem, size = 0x12000, scoped, tag = 'scratch operand']
  %s0 = inlined_call_operand.vmem [shape: f32[1,8,256], index: 0, kind: input, shape index: {}]
  %s1 = inlined_call_operand.vmem [shape: f32[8,72], index: 1, kind: input, shape index: {}]
  %s2 = inlined_call_operand.vmem [shape: f32[8,1], index: 2, kind: input, shape index: {}]
  %s3 = inlined_call_operand.vmem [shape: f32[8,72], index: 3, kind: input, shape index: {}]
  %s4 = inlined_call_operand.vmem [shape: f32[8,1], index: 4, kind: input, shape index: {}]
  %s5 = inlined_call_operand.vmem [shape: f32[1,8,256], index: 5, kind: output, shape index: {}]
  %s6 = sld [smem:[#allocation0]]
  $region30: #{resblock_forward.1} parent=0
    _
  %s8 = ssub.s32 1, %s6
  %s9 = scalar_select 0, %s8, %s6
  // Predicated region
  $region2: #{resblock_forward.1} parent=0 // pred_check
    _
  $region3: #{resblock_forward.1} parent=0 // pred_check_branch
    %11 = sbr.rel (0) target = $region5
  $region4: #{resblock_forward.1} parent=0 // pred_region
    _
  $region5: #{resblock_forward.1} parent=0 // pred_fallthru
    _
  // Predicated region
  $region6: #{resblock_forward.1} parent=0 // pred_check
    _
  $region7: #{resblock_forward.1} parent=0 // pred_check_branch
    %13 = sbr.rel (0) target = $region9
  $region8: #{resblock_forward.1} parent=0 // pred_region
    _
  $region9: #{resblock_forward.1} parent=0 // pred_fallthru
    _
  // Predicated region
  $region10: #{resblock_forward.1} parent=0 // pred_check
    _
  $region11: #{resblock_forward.1} parent=0 // pred_check_branch
    %15 = sbr.rel (0) target = $region13
  $region12: #{resblock_forward.1} parent=0 // pred_region
    _
  $region13: #{resblock_forward.1} parent=0 // pred_fallthru
    _
  // Predicated region
  $region14: #{resblock_forward.1} parent=0 // pred_check
    _
  $region15: #{resblock_forward.1} parent=0 // pred_check_branch
    %17 = sbr.rel (0) target = $region17
  $region16: #{resblock_forward.1} parent=0 // pred_region
    _
  $region17: #{resblock_forward.1} parent=0 // pred_fallthru
    _
  // Predicated region
  $region18: #{resblock_forward.1} parent=0 // pred_check
    _
  $region19: #{resblock_forward.1} parent=0 // pred_check_branch
    %19 = sbr.rel (0) target = $region21
  $region20: #{resblock_forward.1} parent=0 // pred_region
    _
  $region21: #{resblock_forward.1} parent=0 // pred_fallthru
    _
  %v20 = vlaneseq
  %v21 = vand.u32 %v20, 127
  %v22 = vadd.s32 %v21, 128
  %vm23 = vcmp.lt.s32.totalorder %v21, 0
  %v24 = vsub.s32 0, %v21
  %v25 = vsel %vm23, %v24, %v21
  %v26 = vshrl.u32 %v25, 4
  %v27 = vand.u32 %v25, 15
  %v28 = vsub.s32 0, %v27
  %v29 = vsel %vm23, %v28, %v27
  %vm30 = vcmp.lt.s32.totalorder %v22, 0
  %v31 = vsub.s32 0, %v22
  %v32 = vsel %vm30, %v31, %v22
  %v33 = vshrl.u32 %v32, 4
  %v34 = vand.u32 %v32, 15
  %v35 = vsub.s32 0, %v34
  %v36 = vsel %vm30, %v35, %v34
  %vm37 = vcmp.ne.s32.totalorder %v29, 0
  %vm38 = vcmp.ne.s32.totalorder %v36, 0
  %vm39 = vcmp.lt.s32.totalorder %v29, 0
  %vm40 = vcmp.lt.s32.totalorder %v36, 0
  %vm41 = vmand %vm39, %vm37
  %vm42 = vmand %vm40, %vm38
  %v43 = vadd.s32 %v29, 16
  %v44 = vadd.s32 %v36, 16
  %v45 = vsel %vm41, %v43, %v29
  %v46 = vsel %vm42, %v44, %v36
  %vm47 = vcmp.ge.s32.totalorder %v45, 1
  %vm48 = vcmp.ge.s32.totalorder %v46, 1
  %vm49 = vcmp.lt.s32.totalorder %v45, 15
  %vm50 = vcmp.lt.s32.totalorder %v46, 15
  %vm51 = vcmask 138240
  %52 = vst.msk [vmem:[#allocation2] sm:$0xff] %vm51, 0.0
  %vm53 = vcmask 277640
  %54 = vst.msk [vmem:[#allocation2 + $0x10] sm:$0xff] %vm53, 0.0
  %v55 = vld [vmem:[%s0] sm:$0xff]
  %v56 = vld [vmem:[%s0 + $0x8] sm:$0xff]
  %59 = vrot.lane.b32.xlu0 %v55, 17
  %v60 = vpop.permute.xlu0 %59
  %61 = vrot.lane.b32.xlu0 %v56, 17
  %v62 = vpop.permute.xlu0 %61
  %v63 = vsel %vm51, %v60, %v62
  %vm67 = vcmask 1047688
  %68 = vst.msk [vmem:[#allocation2] sm:$0xff] %vm67, %v60
  %69 = vst [vmem:[#allocation2 + $0x8] sm:$0xff] %v63
  %70 = vst.msk [vmem:[#allocation2 + $0x10] sm:$0xff] %vm51, %v62
  %v71 = vld [vmem:[#allocation2] sm:$0xff]
  %v72 = vld [vmem:[#allocation2 + $0x8] sm:$0xff]
  %v73 = vsel %vm47, %v71, 0.0
  %v74 = vsel %vm48, %v72, 0.0
  %75 = vst [vmem:[#allocation3] sm:$0xff] %v73
  %76 = vst [vmem:[#allocation3 + $0x8] sm:$0xff] %v74
  %v77 = vld [vmem:[#allocation2] sm:$0xff]
  %v78 = vld [vmem:[#allocation2 + $0x8] sm:$0xff]
  %v79 = vld [vmem:[#allocation2 + $0x10] sm:$0xff]
  %83 = vrot.lane.b32.xlu0 %v77, 127
  %v84 = vpop.permute.xlu0 %83
  %85 = vrot.lane.b32.xlu0 %v78, 127
  %v86 = vpop.permute.xlu0 %85
  %87 = vrot.lane.b32.xlu0 %v79, 127
  %v88 = vpop.permute.xlu0 %87
  %vm89 = vcmask 1039360
  %v90 = vsel %vm89, %v84, %v86
  %v91 = vsel %vm89, %v86, %v88
  %94 = vst [vmem:[#allocation3 + $0x10] sm:$0xff] %v90
  %95 = vst [vmem:[#allocation3 + $0x18] sm:$0xff] %v91
  %v96 = vld [vmem:[#allocation2] sm:$0xff]
  %v97 = vld [vmem:[#allocation2 + $0x8] sm:$0xff]
  %v98 = vld [vmem:[#allocation2 + $0x10] sm:$0xff]
  %102 = vrot.lane.b32.xlu0 %v96, 126
  %v103 = vpop.permute.xlu0 %102
  %104 = vrot.lane.b32.xlu0 %v97, 126
  %v105 = vpop.permute.xlu0 %104
  %106 = vrot.lane.b32.xlu0 %v98, 126
  %v107 = vpop.permute.xlu0 %106
  %vm108 = vcmask 1031168
  %v109 = vsel %vm108, %v103, %v105
  %v110 = vsel %vm108, %v105, %v107
  %v113 = vsel %vm49, %v109, 0.0
  %v114 = vsel %vm50, %v110, 0.0
  %115 = vst [vmem:[#allocation3 + $0x20] sm:$0xff] %v113
  %116 = vst [vmem:[#allocation3 + $0x28] sm:$0xff] %v114
  %v117 = vld [vmem:[#allocation2] sm:$0xff]
  %v118 = vld [vmem:[#allocation2 + $0x8] sm:$0xff]
  %v119 = vld [vmem:[#allocation2 + $0x10] sm:$0xff]
  %123 = vrot.lane.b32.xlu0 %v117, 112
  %v124 = vpop.permute.xlu0 %123
  %125 = vrot.lane.b32.xlu0 %v118, 112
  %v126 = vpop.permute.xlu0 %125
  %127 = vrot.lane.b32.xlu0 %v119, 112
  %v128 = vpop.permute.xlu0 %127
  %vm129 = vcmask 916480
  %v130 = vsel %vm129, %v124, %v126
  %v131 = vsel %vm129, %v126, %v128
  %v134 = vsel %vm47, %v130, 0.0
  %v135 = vsel %vm48, %v131, 0.0
  %136 = vst [vmem:[#allocation3 + $0x30] sm:$0xff] %v134
  %137 = vst [vmem:[#allocation3 + $0x38] sm:$0xff] %v135
  %v138 = vld [vmem:[#allocation2] sm:$0xff]
  %v139 = vld [vmem:[#allocation2 + $0x8] sm:$0xff]
  %v140 = vld [vmem:[#allocation2 + $0x10] sm:$0xff]
  %144 = vrot.lane.b32.xlu0 %v138, 111
  %v145 = vpop.permute.xlu0 %144
  %146 = vrot.lane.b32.xlu0 %v139, 111
  %v147 = vpop.permute.xlu0 %146
  %148 = vrot.lane.b32.xlu0 %v140, 111
  %v149 = vpop.permute.xlu0 %148
  %vm150 = vcmask 908288
  %v151 = vsel %vm150, %v145, %v147
  %v152 = vsel %vm150, %v147, %v149
  %155 = vst [vmem:[#allocation3 + $0x40] sm:$0xff] %v151
  %156 = vst [vmem:[#allocation3 + $0x48] sm:$0xff] %v152
  %v157 = vld [vmem:[#allocation2] sm:$0xff]
  %v158 = vld [vmem:[#allocation2 + $0x8] sm:$0xff]
  %v159 = vld [vmem:[#allocation2 + $0x10] sm:$0xff]
  %163 = vrot.lane.b32.xlu0 %v157, 110
  %v164 = vpop.permute.xlu0 %163
  %165 = vrot.lane.b32.xlu0 %v158, 110
  %v166 = vpop.permute.xlu0 %165
  %167 = vrot.lane.b32.xlu0 %v159, 110
  %v168 = vpop.permute.xlu0 %167
  %vm169 = vcmask 900096
  %v170 = vsel %vm169, %v164, %v166
  %v171 = vsel %vm169, %v166, %v168
  %v174 = vsel %vm49, %v170, 0.0
  %v175 = vsel %vm50, %v171, 0.0
  %176 = vst [vmem:[#allocation3 + $0x50] sm:$0xff] %v174
  %177 = vst [vmem:[#allocation3 + $0x58] sm:$0xff] %v175
  %v178 = vld [vmem:[#allocation2] sm:$0xff]
  %v179 = vld [vmem:[#allocation2 + $0x8] sm:$0xff]
  %v180 = vld [vmem:[#allocation2 + $0x10] sm:$0xff]
  %184 = vrot.lane.b32.xlu0 %v178, 96
  %v185 = vpop.permute.xlu0 %184
  %186 = vrot.lane.b32.xlu0 %v179, 96
  %v187 = vpop.permute.xlu0 %186
  %188 = vrot.lane.b32.xlu0 %v180, 96
  %v189 = vpop.permute.xlu0 %188
  %vm190 = vcmask 785408
  %v191 = vsel %vm190, %v185, %v187
  %v192 = vsel %vm190, %v187, %v189
  %v195 = vsel %vm47, %v191, 0.0
  %v196 = vsel %vm48, %v192, 0.0
  %197 = vst [vmem:[#allocation3 + $0x60] sm:$0xff] %v195
  %198 = vst [vmem:[#allocation3 + $0x68] sm:$0xff] %v196
  %v199 = vld [vmem:[#allocation2] sm:$0xff]
  %v200 = vld [vmem:[#allocation2 + $0x8] sm:$0xff]
  %v201 = vld [vmem:[#allocation2 + $0x10] sm:$0xff]
  %205 = vrot.lane.b32.xlu0 %v199, 95
  %v206 = vpop.permute.xlu0 %205
  %207 = vrot.lane.b32.xlu0 %v200, 95
  %v208 = vpop.permute.xlu0 %207
  %209 = vrot.lane.b32.xlu0 %v201, 95
  %v210 = vpop.permute.xlu0 %209
  %vm211 = vcmask 777216
  %v212 = vsel %vm211, %v206, %v208
  %v213 = vsel %vm211, %v208, %v210
  %216 = vst [vmem:[#allocation3 + $0x70] sm:$0xff] %v212
  %217 = vst [vmem:[#allocation3 + $0x78] sm:$0xff] %v213
  %v218 = vld [vmem:[#allocation2] sm:$0xff]
  %v219 = vld [vmem:[#allocation2 + $0x8] sm:$0xff]
  %v220 = vld [vmem:[#allocation2 + $0x10] sm:$0xff]
  %224 = vrot.lane.b32.xlu0 %v218, 94
  %v225 = vpop.permute.xlu0 %224
  %226 = vrot.lane.b32.xlu0 %v219, 94
  %v227 = vpop.permute.xlu0 %226
  %228 = vrot.lane.b32.xlu0 %v220, 94
  %v229 = vpop.permute.xlu0 %228
  %vm230 = vcmask 769024
  %v231 = vsel %vm230, %v225, %v227
  %v232 = vsel %vm230, %v227, %v229
  %v235 = vsel %vm49, %v231, 0.0
  %v236 = vsel %vm50, %v232, 0.0
  %237 = vst [vmem:[#allocation3 + $0x80] sm:$0xff] %v235
  %238 = vst [vmem:[#allocation3 + $0x88] sm:$0xff] %v236
  %v239 = vld [vmem:[%s1] sm:$0xff]
  %v240 = vld [vmem:[#allocation3] sm:$0xff]
  %v241 = vld [vmem:[#allocation3 + $0x8] sm:$0xff]
  %v242 = vld [vmem:[#allocation3 + $0x10] sm:$0xff]
  %v243 = vld [vmem:[#allocation3 + $0x18] sm:$0xff]
  %v244 = vld [vmem:[#allocation3 + $0x20] sm:$0xff]
  %v245 = vld [vmem:[#allocation3 + $0x28] sm:$0xff]
  %v246 = vld [vmem:[#allocation3 + $0x30] sm:$0xff]
  %v247 = vld [vmem:[#allocation3 + $0x38] sm:$0xff]
  %v248 = vld [vmem:[#allocation3 + $0x40] sm:$0xff]
  %v249 = vld [vmem:[#allocation3 + $0x48] sm:$0xff]
  %v250 = vld [vmem:[#allocation3 + $0x50] sm:$0xff]
  %v251 = vld [vmem:[#allocation3 + $0x58] sm:$0xff]
  %v252 = vld [vmem:[#allocation3 + $0x60] sm:$0xff]
  %v253 = vld [vmem:[#allocation3 + $0x68] sm:$0xff]
  %v254 = vld [vmem:[#allocation3 + $0x70] sm:$0xff]
  %v255 = vld [vmem:[#allocation3 + $0x78] sm:$0xff]
  %v256 = vld [vmem:[#allocation3 + $0x80] sm:$0xff]
  %v257 = vld [vmem:[#allocation3 + $0x88] sm:$0xff]
  %v258 = vld [vmem:[%s2] sm:$0xff]
  %260 = vset.pattern.permute.xlu0 0
  %261 = vperm.xlu0 %260, %v258
  %v262 = vpop.permute.xlu0 %261
  %vm264 = vcmask 588800
  %v266 = vsel %vm264, %v239, 0
  %268 = vmatprep.subr.mxu0 %v241
  %269 = vmatpush1.msra.mxu0 %v240
  %270 = vmatprep.subr.mxu0 %v243
  %271 = vmatpush1.msra.mxu0 %v242
  %272 = vmatprep.subr.mxu0 %v245
  %273 = vmatpush1.msra.mxu0 %v244
  %274 = vmatprep.subr.mxu0 %v247
  %275 = vmatpush1.msra.mxu0 %v246
  %276 = vmatprep.subr.mxu0 %v249
  %277 = vmatpush1.msra.mxu0 %v248
  %278 = vmatprep.subr.mxu0 %v251
  %279 = vmatpush1.msra.mxu0 %v250
  %280 = vmatprep.subr.mxu0 %v253
  %281 = vmatpush1.msra.mxu0 %v252
  %282 = vmatprep.subr.mxu0 %v255
  %283 = vmatpush1.msra.mxu0 %v254
  %284 = vmatprep.subr.mxu0 %v257
  %285 = vmatpush1.msra.mxu0 %v256
  %286 = vmatprep.subr.mxu0 0.0
  %287 = vmatpush1.msra.mxu0 0.0
  %288 = vmatprep.subr.mxu0 0.0
  %289 = vmatpush1.msra.mxu0 0.0
  %290 = vmatprep.subr.mxu0 0.0
  %291 = vmatpush1.msra.mxu0 0.0
  %292 = vmatprep.subr.mxu0 0.0
  %293 = vmatpush1.msra.mxu0 0.0
  %294 = vmatprep.subr.mxu0 0.0
  %295 = vmatpush1.msra.mxu0 0.0
  %296 = vmatprep.subr.mxu0 0.0
  %297 = vmatpush1.msra.mxu0 0.0
  %298 = vmatprep.subr.mxu0 0.0
  %299 = vmatpush1.msra.mxu0 0.0
  %300 = vmatprep.subr.mxu0 0.0
  %301 = vmatpush1.msra.mxu0 0.0
  %302 = vmatprep.subr.mxu0 0.0
  %303 = vmatpush1.msra.mxu0 0.0
  %304 = vmatprep.subr.mxu0 0.0
  %305 = vmatpush1.msra.mxu0 0.0
  %306 = vmatprep.subr.mxu0 0.0
  %307 = vmatpush1.msra.mxu0 0.0
  %308 = vmatprep.subr.mxu0 0.0
  %309 = vmatpush1.msra.mxu0 0.0
  %310 = vmatprep.subr.mxu0 0.0
  %311 = vmatpush1.msra.mxu0 0.0
  %312 = vmatprep.subr.mxu0 0.0
  %313 = vmatpush1.msra.mxu0 0.0
  %314 = vmatprep.subr.mxu0 0.0
  %315 = vmatpush1.msra.mxu0 0.0
  %316 = vmatprep.subr.mxu0 0.0
  %317 = vmatpush1.msra.mxu0 0.0
  %318 = vmatprep.subr.mxu0 0.0
  %319 = vmatpush1.msra.mxu0 0.0
  %320 = vmatprep.subr.mxu0 0.0
  %321 = vmatpush1.msra.mxu0 0.0
  %322 = vmatprep.subr.mxu0 0.0
  %323 = vmatpush1.msra.mxu0 0.0
  %324 = vmatprep.subr.mxu0 0.0
  %325 = vmatpush1.msra.mxu0 0.0
  %326 = vmatprep.subr.mxu0 0.0
  %327 = vmatpush1.msra.mxu0 0.0
  %328 = vmatprep.subr.mxu0 0.0
  %329 = vmatpush1.msra.mxu0 0.0
  %330 = vmatprep.subr.mxu0 0.0
  %331 = vmatpush1.msra.mxu0 0.0
  %332 = vmatprep.mubr.f32.mxu0 0.0
  %333 = vmatmul.mubr.f32.gmra.mrb[0].mxu0 %v266
  %v334 = vpop.f32.mrb[0].mxu0
  %v335 = vadd.f32 %v262, %v334
  %v336 = vpop.f32.mrb[0].mxu0
  %v337 = vadd.f32 %v262, %v336
  %338 = vdwg.mxu0
  %v339 = vmax.f32 %v335, 0.0
  %v340 = vmax.f32 %v337, 0.0
  %343 = vrot.lane.b32.xlu0 %v339, 17
  %v344 = vpop.permute.xlu0 %343
  %345 = vrot.lane.b32.xlu0 %v340, 17
  %v346 = vpop.permute.xlu0 %345
  %v347 = vsel %vm51, %v344, %v346
  %351 = vst.msk [vmem:[#allocation2] sm:$0xff] %vm67, %v344
  %352 = vst [vmem:[#allocation2 + $0x8] sm:$0xff] %v347
  %353 = vst.msk [vmem:[#allocation2 + $0x10] sm:$0xff] %vm51, %v346
  %v354 = vld [vmem:[#allocation2] sm:$0xff]
  %v355 = vld [vmem:[#allocation2 + $0x8] sm:$0xff]
  %v356 = vsel %vm47, %v354, 0.0
  %v357 = vsel %vm48, %v355, 0.0
  %358 = vst [vmem:[#allocation3] sm:$0xff] %v356
  %359 = vst [vmem:[#allocation3 + $0x8] sm:$0xff] %v357
  %v360 = vld [vmem:[#allocation2] sm:$0xff]
  %v361 = vld [vmem:[#allocation2 + $0x8] sm:$0xff]
  %v362 = vld [vmem:[#allocation2 + $0x10] sm:$0xff]
  %366 = vrot.lane.b32.xlu0 %v360, 127
  %v367 = vpop.permute.xlu0 %366
  %368 = vrot.lane.b32.xlu0 %v361, 127
  %v369 = vpop.permute.xlu0 %368
  %370 = vrot.lane.b32.xlu0 %v362, 127
  %v371 = vpop.permute.xlu0 %370
  %v372 = vsel %vm89, %v367, %v369
  %v373 = vsel %vm89, %v369, %v371
  %376 = vst [vmem:[#allocation3 + $0x10] sm:$0xff] %v372
  %377 = vst [vmem:[#allocation3 + $0x18] sm:$0xff] %v373
  %v378 = vld [vmem:[#allocation2] sm:$0xff]
  %v379 = vld [vmem:[#allocation2 + $0x8] sm:$0xff]
  %v380 = vld [vmem:[#allocation2 + $0x10] sm:$0xff]
  %384 = vrot.lane.b32.xlu0 %v378, 126
  %v385 = vpop.permute.xlu0 %384
  %386 = vrot.lane.b32.xlu0 %v379, 126
  %v387 = vpop.permute.xlu0 %386
  %388 = vrot.lane.b32.xlu0 %v380, 126
  %v389 = vpop.permute.xlu0 %388
  %v390 = vsel %vm108, %v385, %v387
  %v391 = vsel %vm108, %v387, %v389
  %v394 = vsel %vm49, %v390, 0.0
  %v395 = vsel %vm50, %v391, 0.0
  %396 = vst [vmem:[#allocation3 + $0x20] sm:$0xff] %v394
  %397 = vst [vmem:[#allocation3 + $0x28] sm:$0xff] %v395
  %v398 = vld [vmem:[#allocation2] sm:$0xff]
  %v399 = vld [vmem:[#allocation2 + $0x8] sm:$0xff]
  %v400 = vld [vmem:[#allocation2 + $0x10] sm:$0xff]
  %404 = vrot.lane.b32.xlu0 %v398, 112
  %v405 = vpop.permute.xlu0 %404
  %406 = vrot.lane.b32.xlu0 %v399, 112
  %v407 = vpop.permute.xlu0 %406
  %408 = vrot.lane.b32.xlu0 %v400, 112
  %v409 = vpop.permute.xlu0 %408
  %v410 = vsel %vm129, %v405, %v407
  %v411 = vsel %vm129, %v407, %v409
  %v414 = vsel %vm47, %v410, 0.0
  %v415 = vsel %vm48, %v411, 0.0
  %416 = vst [vmem:[#allocation3 + $0x30] sm:$0xff] %v414
  %417 = vst [vmem:[#allocation3 + $0x38] sm:$0xff] %v415
  %v418 = vld [vmem:[#allocation2] sm:$0xff]
  %v419 = vld [vmem:[#allocation2 + $0x8] sm:$0xff]
  %v420 = vld [vmem:[#allocation2 + $0x10] sm:$0xff]
  %424 = vrot.lane.b32.xlu0 %v418, 111
  %v425 = vpop.permute.xlu0 %424
  %426 = vrot.lane.b32.xlu0 %v419, 111
  %v427 = vpop.permute.xlu0 %426
  %428 = vrot.lane.b32.xlu0 %v420, 111
  %v429 = vpop.permute.xlu0 %428
  %v430 = vsel %vm150, %v425, %v427
  %v431 = vsel %vm150, %v427, %v429
  %434 = vst [vmem:[#allocation3 + $0x40] sm:$0xff] %v430
  %435 = vst [vmem:[#allocation3 + $0x48] sm:$0xff] %v431
  %v436 = vld [vmem:[#allocation2] sm:$0xff]
  %v437 = vld [vmem:[#allocation2 + $0x8] sm:$0xff]
  %v438 = vld [vmem:[#allocation2 + $0x10] sm:$0xff]
  %442 = vrot.lane.b32.xlu0 %v436, 110
  %v443 = vpop.permute.xlu0 %442
  %444 = vrot.lane.b32.xlu0 %v437, 110
  %v445 = vpop.permute.xlu0 %444
  %446 = vrot.lane.b32.xlu0 %v438, 110
  %v447 = vpop.permute.xlu0 %446
  %v448 = vsel %vm169, %v443, %v445
  %v449 = vsel %vm169, %v445, %v447
  %v452 = vsel %vm49, %v448, 0.0
  %v453 = vsel %vm50, %v449, 0.0
  %454 = vst [vmem:[#allocation3 + $0x50] sm:$0xff] %v452
  %455 = vst [vmem:[#allocation3 + $0x58] sm:$0xff] %v453
  %v456 = vld [vmem:[#allocation2] sm:$0xff]
  %v457 = vld [vmem:[#allocation2 + $0x8] sm:$0xff]
  %v458 = vld [vmem:[#allocation2 + $0x10] sm:$0xff]
  %462 = vrot.lane.b32.xlu0 %v456, 96
  %v463 = vpop.permute.xlu0 %462
  %464 = vrot.lane.b32.xlu0 %v457, 96
  %v465 = vpop.permute.xlu0 %464
  %466 = vrot.lane.b32.xlu0 %v458, 96
  %v467 = vpop.permute.xlu0 %466
  %v468 = vsel %vm190, %v463, %v465
  %v469 = vsel %vm190, %v465, %v467
  %v472 = vsel %vm47, %v468, 0.0
  %v473 = vsel %vm48, %v469, 0.0
  %474 = vst [vmem:[#allocation3 + $0x60] sm:$0xff] %v472
  %475 = vst [vmem:[#allocation3 + $0x68] sm:$0xff] %v473
  %v476 = vld [vmem:[#allocation2] sm:$0xff]
  %v477 = vld [vmem:[#allocation2 + $0x8] sm:$0xff]
  %v478 = vld [vmem:[#allocation2 + $0x10] sm:$0xff]
  %482 = vrot.lane.b32.xlu0 %v476, 95
  %v483 = vpop.permute.xlu0 %482
  %484 = vrot.lane.b32.xlu0 %v477, 95
  %v485 = vpop.permute.xlu0 %484
  %486 = vrot.lane.b32.xlu0 %v478, 95
  %v487 = vpop.permute.xlu0 %486
  %v488 = vsel %vm211, %v483, %v485
  %v489 = vsel %vm211, %v485, %v487
  %492 = vst [vmem:[#allocation3 + $0x70] sm:$0xff] %v488
  %493 = vst [vmem:[#allocation3 + $0x78] sm:$0xff] %v489
  %v494 = vld [vmem:[#allocation2] sm:$0xff]
  %v495 = vld [vmem:[#allocation2 + $0x8] sm:$0xff]
  %v496 = vld [vmem:[#allocation2 + $0x10] sm:$0xff]
  %500 = vrot.lane.b32.xlu0 %v494, 94
  %v501 = vpop.permute.xlu0 %500
  %502 = vrot.lane.b32.xlu0 %v495, 94
  %v503 = vpop.permute.xlu0 %502
  %504 = vrot.lane.b32.xlu0 %v496, 94
  %v505 = vpop.permute.xlu0 %504
  %v506 = vsel %vm230, %v501, %v503
  %v507 = vsel %vm230, %v503, %v505
  %v510 = vsel %vm49, %v506, 0.0
  %v511 = vsel %vm50, %v507, 0.0
  %512 = vst [vmem:[#allocation3 + $0x80] sm:$0xff] %v510
  %513 = vst [vmem:[#allocation3 + $0x88] sm:$0xff] %v511
  %v514 = vld [vmem:[%s3] sm:$0xff]
  %v515 = vld [vmem:[#allocation3] sm:$0xff]
  %v516 = vld [vmem:[#allocation3 + $0x8] sm:$0xff]
  %v517 = vld [vmem:[#allocation3 + $0x10] sm:$0xff]
  %v518 = vld [vmem:[#allocation3 + $0x18] sm:$0xff]
  %v519 = vld [vmem:[#allocation3 + $0x20] sm:$0xff]
  %v520 = vld [vmem:[#allocation3 + $0x28] sm:$0xff]
  %v521 = vld [vmem:[#allocation3 + $0x30] sm:$0xff]
  %v522 = vld [vmem:[#allocation3 + $0x38] sm:$0xff]
  %v523 = vld [vmem:[#allocation3 + $0x40] sm:$0xff]
  %v524 = vld [vmem:[#allocation3 + $0x48] sm:$0xff]
  %v525 = vld [vmem:[#allocation3 + $0x50] sm:$0xff]
  %v526 = vld [vmem:[#allocation3 + $0x58] sm:$0xff]
  %v527 = vld [vmem:[#allocation3 + $0x60] sm:$0xff]
  %v528 = vld [vmem:[#allocation3 + $0x68] sm:$0xff]
  %v529 = vld [vmem:[#allocation3 + $0x70] sm:$0xff]
  %v530 = vld [vmem:[#allocation3 + $0x78] sm:$0xff]
  %v531 = vld [vmem:[#allocation3 + $0x80] sm:$0xff]
  %v532 = vld [vmem:[#allocation3 + $0x88] sm:$0xff]
  %v533 = vld [vmem:[%s4] sm:$0xff]
  %535 = vset.pattern.permute.xlu0 0
  %536 = vperm.xlu0 %535, %v533
  %v537 = vpop.permute.xlu0 %536
  %v540 = vsel %vm264, %v514, 0
  %542 = vmatprep.subr.mxu0 %v516
  %543 = vmatpush1.msra.mxu0 %v515
  %544 = vmatprep.subr.mxu0 %v518
  %545 = vmatpush1.msra.mxu0 %v517
  %546 = vmatprep.subr.mxu0 %v520
  %547 = vmatpush1.msra.mxu0 %v519
  %548 = vmatprep.subr.mxu0 %v522
  %549 = vmatpush1.msra.mxu0 %v521
  %550 = vmatprep.subr.mxu0 %v524
  %551 = vmatpush1.msra.mxu0 %v523
  %552 = vmatprep.subr.mxu0 %v526
  %553 = vmatpush1.msra.mxu0 %v525
  %554 = vmatprep.subr.mxu0 %v528
  %555 = vmatpush1.msra.mxu0 %v527
  %556 = vmatprep.subr.mxu0 %v530
  %557 = vmatpush1.msra.mxu0 %v529
  %558 = vmatprep.subr.mxu0 %v532
  %559 = vmatpush1.msra.mxu0 %v531
  %560 = vmatprep.subr.mxu0 0.0
  %561 = vmatpush1.msra.mxu0 0.0
  %562 = vmatprep.subr.mxu0 0.0
  %563 = vmatpush1.msra.mxu0 0.0
  %564 = vmatprep.subr.mxu0 0.0
  %565 = vmatpush1.msra.mxu0 0.0
  %566 = vmatprep.subr.mxu0 0.0
  %567 = vmatpush1.msra.mxu0 0.0
  %568 = vmatprep.subr.mxu0 0.0
  %569 = vmatpush1.msra.mxu0 0.0
  %570 = vmatprep.subr.mxu0 0.0
  %571 = vmatpush1.msra.mxu0 0.0
  %572 = vmatprep.subr.mxu0 0.0
  %573 = vmatpush1.msra.mxu0 0.0
  %574 = vmatprep.subr.mxu0 0.0
  %575 = vmatpush1.msra.mxu0 0.0
  %576 = vmatprep.subr.mxu0 0.0
  %577 = vmatpush1.msra.mxu0 0.0
  %578 = vmatprep.subr.mxu0 0.0
  %579 = vmatpush1.msra.mxu0 0.0
  %580 = vmatprep.subr.mxu0 0.0
  %581 = vmatpush1.msra.mxu0 0.0
  %582 = vmatprep.subr.mxu0 0.0
  %583 = vmatpush1.msra.mxu0 0.0
  %584 = vmatprep.subr.mxu0 0.0
  %585 = vmatpush1.msra.mxu0 0.0
  %586 = vmatprep.subr.mxu0 0.0
  %587 = vmatpush1.msra.mxu0 0.0
  %588 = vmatprep.subr.mxu0 0.0
  %589 = vmatpush1.msra.mxu0 0.0
  %590 = vmatprep.subr.mxu0 0.0
  %591 = vmatpush1.msra.mxu0 0.0
  %592 = vmatprep.subr.mxu0 0.0
  %593 = vmatpush1.msra.mxu0 0.0
  %594 = vmatprep.subr.mxu0 0.0
  %595 = vmatpush1.msra.mxu0 0.0
  %596 = vmatprep.subr.mxu0 0.0
  %597 = vmatpush1.msra.mxu0 0.0
  %598 = vmatprep.subr.mxu0 0.0
  %599 = vmatpush1.msra.mxu0 0.0
  %600 = vmatprep.subr.mxu0 0.0
  %601 = vmatpush1.msra.mxu0 0.0
  %602 = vmatprep.subr.mxu0 0.0
  %603 = vmatpush1.msra.mxu0 0.0
  %604 = vmatprep.subr.mxu0 0.0
  %605 = vmatpush1.msra.mxu0 0.0
  %606 = vmatprep.mubr.f32.mxu0 0.0
  %607 = vmatmul.mubr.f32.gmra.mrb[0].mxu0 %v540
  %v608 = vpop.f32.mrb[0].mxu0
  %v609 = vadd.f32 %v537, %v608
  %v610 = vpop.f32.mrb[0].mxu0
  %v611 = vadd.f32 %v537, %v610
  %612 = vdwg.mxu0
  %v613 = vadd.f32 %v609, %v55
  %v614 = vadd.f32 %v611, %v56
  %v615 = vmax.f32 %v613, 0.0
  %v616 = vmax.f32 %v614, 0.0
  %617 = vst [vmem:[%s5] sm:$0xff] %v615
  %618 = vst [vmem:[%s5 + $0x8] sm:$0xff] %v616
  // Predicated region
  $region22: #{resblock_forward.1} parent=0 // pred_check
    _
  $region23: #{resblock_forward.1} parent=0 // pred_check_branch
    %620 = sbr.rel (0) target = $region25
  $region24: #{resblock_forward.1} parent=0 // pred_region
    _
  $region25: #{resblock_forward.1} parent=0 // pred_fallthru
    _
  // Predicated region
  $region26: #{resblock_forward.1} parent=0 // pred_check
    _
  $region27: #{resblock_forward.1} parent=0 // pred_check_branch
    %622 = sbr.rel (0) target = $region29
  $region28: #{resblock_forward.1} parent=0 // pred_region
    _
  $region29: #{resblock_forward.1} parent=0 // pred_fallthru
    _

</llo_original>
